<compile_context>
chip_gen: v7x
topology: tpu7x:2x2x1
jax: 0.10.0
libtpu: 0.0.40
codegen_flags: <defaults>
</compile_context>

<pallas_src>
import math
import numpy as np
import jax
import jax.numpy as jnp
from jax import lax
from jax.experimental import pallas as pl
from jax.experimental.pallas import tpu as pltpu

INNER = 64                         # self.inner_dim in the torch module
HALF = INNER // 2
NEG_BIG = 1.0e12                   # the 1e12 masking constant
INV_SCALE = 1.0 / math.sqrt(INNER)
NEG_MASKED = -NEG_BIG * INV_SCALE  # mask constant after folding 1/sqrt(64)


# ----------------------------------------------------------------------------
# glue: box-id computation (vectorized equivalent of the torch python loop:
# consecutive identical boxes share a run id; run ids count 0,1,2,... but the
# final run keeps the initial value 0, exactly as the torch loop leaves it).
# ----------------------------------------------------------------------------
def create_box_ids(boxes):
    b = boxes.shape[0]
    change = jnp.any(boxes[:, 1:, :] != boxes[:, :-1, :], axis=-1)
    change = jnp.concatenate([jnp.zeros((b, 1), dtype=bool), change], axis=1)
    run_idx = jnp.cumsum(change.astype(jnp.int32), axis=1)          # (B, S)
    last = run_idx[:, -1:]
    return jnp.where(run_idx == last, 0, run_idx).astype(jnp.float32)


def _round_up(v, m):
    return ((v + m - 1) // m) * m


# ----------------------------------------------------------------------------
# Pallas kernel: grid = (batch, label, n_tile)
# ----------------------------------------------------------------------------
def hga_head_kernel(x_ref, w_ref, b_ref, cs_ref, mask_ref, out_ref,
                    q_scr, k_scr):
    n = pl.program_id(2)
    S = q_scr.shape[0]           # unpadded query length (static)
    TN = out_ref.shape[3]        # n-tile width (static, multiple of 128)

    # ---- once per (batch, label): fused q|k projection + box-RoPE ----------
    @pl.when(n == 0)
    def _():
        x = x_ref[0]                                                 # (S_pad, H) bf16
        qk = jnp.dot(x, w_ref[0],
                     preferred_element_type=jnp.float32) + b_ref[0]  # (S_pad, 128) f32
        cs = cs_ref[0]                                               # (S_pad, 64) f32
        c, s = cs[:, :HALF], cs[:, HALF:]                            # (S_pad, 32)
        # de-interleaved columns: [q_even | q_odd | k_even | k_odd]
        qe, qo = qk[:, 0:HALF], qk[:, HALF:INNER]
        ke, ko = qk[:, INNER:INNER + HALF], qk[:, INNER + HALF:]
        q = jnp.concatenate([qe * c - qo * s, qo * c + qe * s], axis=-1)
        k = jnp.concatenate([ke * c - ko * s, ko * c + ke * s], axis=-1)
        q_scr[...] = q[:S].astype(jnp.bfloat16)                      # (S,   64)
        k_scr[...] = k.astype(jnp.bfloat16)                          # (S_pad, 64)

    # ---- per n-tile: q @ k_tile^T on the MXU + lean masking epilogue -------
    off = pl.multiple_of(n * TN, TN)
    k_tile = k_scr[pl.ds(off, TN), :]                                # (TN, 64) bf16
    s_tile = lax.dot_general(q_scr[...], k_tile, (((1,), (1,)), ((), ())),
                             preferred_element_type=jnp.float32)     # (S, TN)

    pad = mask_ref[0]                                                # (1, TN)
    neg = jnp.float32(NEG_MASKED)
    rowi = lax.broadcasted_iota(jnp.int32, (S, TN), 0)
    coli = lax.broadcasted_iota(jnp.int32, (S, TN), 1) + off
    out = jnp.where(pad > 0.0, s_tile, neg)
    out = out + jnp.where(rowi > coli, neg, jnp.float32(0.0))
    out_ref[0, 0] = out.astype(out_ref.dtype)


# ----------------------------------------------------------------------------
# wrapper
# ----------------------------------------------------------------------------
def hga_head(x, attention_mask, boxes, dense_w, dense_b, num_labels,
             out_dtype=jnp.float32):
    B, S, H = x.shape
    L = num_labels

    # ---- per-batch RoPE phases, packed lane-dense: [cos(32) | sin(32)] -----
    box_ids = create_box_ids(boxes)                                  # (B, S)
    ind = jnp.arange(HALF, dtype=jnp.float32)
    theta = jnp.power(10000.0, -2.0 * ind / INNER)                   # (32,)
    ang = box_ids[..., None] * theta                                 # (B, S, 32)
    cs = jnp.concatenate([jnp.cos(ang), jnp.sin(ang)], axis=-1)      # (B, S, 64)

    # ---- fused per-label q|k weights, de-interleaved column basis ----------
    perm = np.concatenate([np.arange(0, INNER, 2), np.arange(1, INNER, 2)])
    w3 = dense_w.reshape(H, L, 2 * INNER)
    b2 = dense_b.reshape(L, 2 * INNER)
    wq = w3[:, :, :INNER][:, :, perm] * INV_SCALE    # fold 1/sqrt(64) into q
    wk = w3[:, :, INNER:][:, :, perm]
    bq = b2[:, :INNER][:, perm] * INV_SCALE
    bk = b2[:, INNER:][:, perm]
    w_qk = jnp.transpose(jnp.concatenate([wq, wk], axis=-1), (1, 0, 2))
    w_qk = w_qk.astype(jnp.bfloat16)                                 # (L, H, 128)
    b_qk = jnp.concatenate([bq, bk], axis=-1)[:, None, :]            # (L, 1, 128) f32
    b_qk = b_qk.astype(jnp.float32)

    # ---- pad only the key/n axis so output stores are lane-dense -----------
    S_pad = max(_round_up(S, 128), 128)
    pad_n = S_pad - S
    x_p = jnp.pad(x, ((0, 0), (0, pad_n), (0, 0))).astype(jnp.bfloat16)
    cs_p = jnp.pad(cs, ((0, 0), (0, pad_n), (0, 0)))
    mask_p = jnp.pad(attention_mask.astype(jnp.float32),
                     ((0, 0), (0, pad_n)))[:, None, :]               # (B, 1, S_pad)

    # output n-tile: largest of 512/256/128 that divides S_pad and keeps the
    # epilogue temporaries bounded for very long sequences.
    TN = 128
    for cand in (512, 256):
        if S_pad % cand == 0 and S * cand <= (1 << 20):
            TN = cand
            break
    NT = S_pad // TN

    # VMEM budget: double-buffered blocks + scratch + in-kernel temporaries,
    # capped at 48 MiB (headroom below v7x's 64 MiB physical VMEM).
    est = (2 * S_pad * H * 2                  # x (bf16, double-buffered)
           + 2 * H * 2 * INNER * 2            # W_qk (bf16)
           + 2 * 2 * INNER * 4                # bias
           + 2 * S_pad * INNER * 4            # cos|sin
           + 2 * TN * 4                       # pad mask
           + 2 * S * TN * 4                   # output tile (f32)
           + (S + S_pad) * INNER * 2          # q/k scratch (bf16)
           + S_pad * 2 * INNER * 4            # projection temporaries
           + 8 * S_pad * INNER * 4            # RoPE temporaries
           + 8 * S * TN * 4)                  # epilogue temporaries
    vmem_limit = int(min(max(2 * est, 32 * 1024 * 1024), 48 * 1024 * 1024))

    out = pl.pallas_call(
        hga_head_kernel,
        out_shape=jax.ShapeDtypeStruct((B, L, S, S_pad), out_dtype),
        grid_spec=pltpu.PrefetchScalarGridSpec(
            num_scalar_prefetch=0,
            grid=(B, L, NT),      # n innermost; x/cs DMA'd once per batch
            in_specs=[
                pl.BlockSpec((1, S_pad, H), lambda b, l, n: (b, 0, 0)),       # x
                pl.BlockSpec((1, H, 2 * INNER), lambda b, l, n: (l, 0, 0)),   # W_qk
                pl.BlockSpec((1, 1, 2 * INNER), lambda b, l, n: (l, 0, 0)),   # b_qk
                pl.BlockSpec((1, S_pad, INNER), lambda b, l, n: (b, 0, 0)),   # cos|sin
                pl.BlockSpec((1, 1, TN), lambda b, l, n: (b, 0, n)),          # pad mask
            ],
            out_specs=pl.BlockSpec((1, 1, S, TN), lambda b, l, n: (b, l, 0, n)),
            scratch_shapes=[pltpu.VMEM((S, INNER), jnp.bfloat16),     # q (RoPE'd)
                            pltpu.VMEM((S_pad, INNER), jnp.bfloat16)],  # k (RoPE'd)
        ),
        compiler_params=pltpu.CompilerParams(
            dimension_semantics=("parallel", "parallel", "arbitrary"),
            vmem_limit_bytes=vmem_limit),
    )(x_p, w_qk, b_qk, cs_p, mask_p)

    if pad_n:
        # TODO(synk): consumers that tolerate a padded key axis (or bf16
        # output) can take the (B, L, S, S_pad) tensor directly and skip this
        # extra HBM round trip.
        out = out[..., :S]
    return out


# ----------------------------------------------------------------------------
# pure-JAX reference mirroring the torch forward exactly
# ----------------------------------------------------------------------------
def ref_forward(x, attention_mask, boxes, dense_w, dense_b, num_labels):
    B, S, H = x.shape
    L = num_labels
    out = x @ dense_w + dense_b                                      # (B, S, L*128)
    out = out.reshape(B, S, L, 2 * INNER)                            # split + stack
    qw, kw = out[..., :INNER], out[..., INNER:]

    box_ids = create_box_ids(boxes)                                  # (B, S)
    ind = jnp.arange(INNER // 2, dtype=jnp.float32)
    theta = jnp.power(10000.0, -2.0 * ind / INNER)
    emb = box_ids[..., None] * theta                                 # (B, S, 32)
    pos = jnp.stack([jnp.sin(emb), jnp.cos(emb)], -1).reshape(B, S, INNER)
    cos_pos = jnp.repeat(pos[..., None, 1::2], 2, axis=-1)
    sin_pos = jnp.repeat(pos[..., None, ::2], 2, axis=-1)

    def rope(v):
        v2 = jnp.stack([-v[..., 1::2], v[..., ::2]], -1).reshape(v.shape)
        return v * cos_pos + v2 * sin_pos

    qw, kw = rope(qw), rope(kw)
    logits = jnp.einsum('bmhd,bnhd->bhmn', qw, kw)
    pad = attention_mask.astype(jnp.float32)[:, None, None, :]
    logits = logits * pad - (1.0 - pad) * NEG_BIG
    tril = jnp.tril(jnp.ones((S, S), jnp.float32), -1)
    logits = logits - tril * NEG_BIG
    return logits / math.sqrt(INNER)


if __name__ == "__main__":
    B, S, H, L = 2, 8, 32, 4

    key = jax.random.PRNGKey(0)
    k1, k2, k3 = jax.random.split(key, 3)
    x = jax.random.normal(k1, (B, S, H), jnp.float32)
    dense_w = jax.random.normal(k2, (H, L * 2 * INNER), jnp.float32) * 0.02
    dense_b = jax.random.normal(k3, (L * 2 * INNER,), jnp.float32) * 0.02

    # boxes: runs of identical boxes -> box-run position ids
    g0 = jnp.arange(S) // 3
    g1 = jnp.arange(S) // 2
    groups = jnp.stack([g0, g1], 0).astype(jnp.float32)              # (B, S)
    boxes = jnp.stack([groups, groups * 2.0, groups + 1.0, groups * 3.0], -1)

    attention_mask = jnp.array([[1.0] * S,
                                [1.0] * (S - 2) + [0.0] * 2], jnp.float32)

    out = hga_head(x, attention_mask, boxes, dense_w, dense_b, L)
    out = jax.block_until_ready(out)

    ref = ref_forward(x, attention_mask, boxes, dense_w, dense_b, L)
    np.testing.assert_allclose(np.asarray(out), np.asarray(ref),
                               rtol=1e-3, atol=1e-3)
    print("KERNEL_OK")
</pallas_src>

<mosaic_0001>
module attributes {stable_mosaic.version = 11 : i64} {
  func.func @hga_head_kernel(%arg0: i32, %arg1: i32, %arg2: i32, %arg3: memref<1x128x32xbf16, #tpu.memory_space<vmem>>, %arg4: memref<1x32x128xbf16, #tpu.memory_space<vmem>>, %arg5: memref<1x1x128xf32, #tpu.memory_space<vmem>>, %arg6: memref<1x128x64xf32, #tpu.memory_space<vmem>>, %arg7: memref<1x1x128xf32, #tpu.memory_space<vmem>>, %arg8: memref<1x1x8x128xf32, #tpu.memory_space<vmem>>, %arg9: memref<8x64xbf16, #tpu.memory_space<vmem>>, %arg10: memref<128x64xbf16, #tpu.memory_space<vmem>>) attributes {dimension_semantics = [#tpu.dimension_semantics<parallel>, #tpu.dimension_semantics<parallel>, #tpu.dimension_semantics<arbitrary>], iteration_bounds = array<i64: 2, 4, 1>, scalar_prefetch = 0 : i64, scratch_operands = 2 : i64, tpu.core_type = #tpu.core_type<tc>, window_params = [{transform_indices = @transform_0, window_bounds = array<i64: 1, 128, 32>}, {transform_indices = @transform_1, window_bounds = array<i64: 1, 32, 128>}, {transform_indices = @transform_2, window_bounds = array<i64: 1, 1, 128>}, {transform_indices = @transform_3, window_bounds = array<i64: 1, 128, 64>}, {transform_indices = @transform_4, window_bounds = array<i64: 1, 1, 128>}, {transform_indices = @transform_5, window_bounds = array<i64: 1, 1, 8, 128>}]} {
    %c0_i32 = arith.constant 0 : i32
    %0 = arith.cmpi eq, %arg2, %c0_i32 : i32
    %1 = arith.extui %0 : i1 to i32
    %c0_i32_0 = arith.constant 0 : i32
    %2 = arith.cmpi ne, %1, %c0_i32_0 : i32
    scf.if %2 {
      %c0_14 = arith.constant 0 : index
      %c0_15 = arith.constant 0 : index
      %c0_16 = arith.constant 0 : index
      %29 = vector.load %arg3[%c0_14, %c0_15, %c0_16] : memref<1x128x32xbf16, #tpu.memory_space<vmem>>, vector<1x128x32xbf16>
      %30 = vector.shape_cast %29 : vector<1x128x32xbf16> to vector<128x32xbf16>
      %c0_17 = arith.constant 0 : index
      %c0_18 = arith.constant 0 : index
      %c0_19 = arith.constant 0 : index
      %31 = vector.load %arg4[%c0_17, %c0_18, %c0_19] : memref<1x32x128xbf16, #tpu.memory_space<vmem>>, vector<1x32x128xbf16>
      %32 = vector.shape_cast %31 : vector<1x32x128xbf16> to vector<32x128xbf16>
      %cst_20 = arith.constant dense<0.000000e+00> : vector<128x128xf32>
      %33 = tpu.matmul %30, %32, %cst_20 {dimension_numbers = #tpu.dot_dimension_numbers<[1], [0], [0], [1], [0, 0, 1, 1], [], []>} : vector<128x32xbf16>, vector<32x128xbf16>, vector<128x128xf32> -> vector<128x128xf32>
      %c0_21 = arith.constant 0 : index
      %c0_22 = arith.constant 0 : index
      %c0_23 = arith.constant 0 : index
      %34 = vector.load %arg5[%c0_21, %c0_22, %c0_23] : memref<1x1x128xf32, #tpu.memory_space<vmem>>, vector<1x1x128xf32>
      %35 = vector.shape_cast %34 : vector<1x1x128xf32> to vector<1x128xf32>
      %36 = vector.broadcast %35 : vector<1x128xf32> to vector<128x128xf32>
      %37 = arith.addf %33, %36 : vector<128x128xf32>
      %c0_24 = arith.constant 0 : index
      %c0_25 = arith.constant 0 : index
      %c0_26 = arith.constant 0 : index
      %38 = vector.load %arg6[%c0_24, %c0_25, %c0_26] : memref<1x128x64xf32, #tpu.memory_space<vmem>>, vector<1x128x64xf32>
      %39 = vector.shape_cast %38 : vector<1x128x64xf32> to vector<128x64xf32>
      %40 = vector.extract_strided_slice %39 {offsets = [0, 0], sizes = [128, 32], strides = [1, 1]} : vector<128x64xf32> to vector<128x32xf32>
      %41 = vector.extract_strided_slice %39 {offsets = [0, 32], sizes = [128, 32], strides = [1, 1]} : vector<128x64xf32> to vector<128x32xf32>
      %42 = vector.extract_strided_slice %37 {offsets = [0, 0], sizes = [128, 32], strides = [1, 1]} : vector<128x128xf32> to vector<128x32xf32>
      %43 = vector.extract_strided_slice %37 {offsets = [0, 32], sizes = [128, 32], strides = [1, 1]} : vector<128x128xf32> to vector<128x32xf32>
      %44 = vector.extract_strided_slice %37 {offsets = [0, 64], sizes = [128, 32], strides = [1, 1]} : vector<128x128xf32> to vector<128x32xf32>
      %45 = vector.extract_strided_slice %37 {offsets = [0, 96], sizes = [128, 32], strides = [1, 1]} : vector<128x128xf32> to vector<128x32xf32>
      %46 = arith.mulf %42, %40 : vector<128x32xf32>
      %47 = arith.mulf %43, %41 : vector<128x32xf32>
      %48 = arith.subf %46, %47 : vector<128x32xf32>
      %49 = arith.mulf %43, %40 : vector<128x32xf32>
      %50 = arith.mulf %42, %41 : vector<128x32xf32>
      %51 = arith.addf %49, %50 : vector<128x32xf32>
      %52 = tpu.concatenate %48, %51 in 1 : vector<128x32xf32>, vector<128x32xf32> -> vector<128x64xf32>
      %53 = arith.mulf %44, %40 : vector<128x32xf32>
      %54 = arith.mulf %45, %41 : vector<128x32xf32>
      %55 = arith.subf %53, %54 : vector<128x32xf32>
      %56 = arith.mulf %45, %40 : vector<128x32xf32>
      %57 = arith.mulf %44, %41 : vector<128x32xf32>
      %58 = arith.addf %56, %57 : vector<128x32xf32>
      %59 = tpu.concatenate %55, %58 in 1 : vector<128x32xf32>, vector<128x32xf32> -> vector<128x64xf32>
      %60 = vector.extract_strided_slice %52 {offsets = [0, 0], sizes = [8, 64], strides = [1, 1]} : vector<128x64xf32> to vector<8x64xf32>
      %61 = arith.truncf %60 : vector<8x64xf32> to vector<8x64xbf16>
      %c0_27 = arith.constant 0 : index
      %c0_28 = arith.constant 0 : index
      %62 = vector.load %arg9[%c0_27, %c0_28] : memref<8x64xbf16, #tpu.memory_space<vmem>>, vector<8x64xbf16>
      tpu.vector_store %arg9[%c0_27, %c0_28], %61 {strides = array<i32>} : memref<8x64xbf16, #tpu.memory_space<vmem>>, vector<8x64xbf16>,
      %63 = arith.truncf %59 : vector<128x64xf32> to vector<128x64xbf16>
      %c0_29 = arith.constant 0 : index
      %c0_30 = arith.constant 0 : index
      %64 = vector.load %arg10[%c0_29, %c0_30] : memref<128x64xbf16, #tpu.memory_space<vmem>>, vector<128x64xbf16>
      tpu.vector_store %arg10[%c0_29, %c0_30], %63 {strides = array<i32>} : memref<128x64xbf16, #tpu.memory_space<vmem>>, vector<128x64xbf16>,
    } else {
    }
    %c128_i32 = arith.constant 128 : i32
    %3 = arith.muli %arg2, %c128_i32 : i32
    %4 = tpu.assume_multiple %3, 128 : i32
    %5 = arith.index_cast %4 : i32 to index
    %c0 = arith.constant 0 : index
    %6 = vector.load %arg10[%5, %c0] : memref<128x64xbf16, #tpu.memory_space<vmem>>, vector<128x64xbf16>
    %c0_1 = arith.constant 0 : index
    %c0_2 = arith.constant 0 : index
    %7 = vector.load %arg9[%c0_1, %c0_2] : memref<8x64xbf16, #tpu.memory_space<vmem>>, vector<8x64xbf16>
    %cst = arith.constant dense<0.000000e+00> : vector<8x128xf32>
    %8 = tpu.matmul %7, %6, %cst {dimension_numbers = #tpu.dot_dimension_numbers<[1], [1], [0], [0], [0, 0, 1, 0], [], []>} : vector<8x64xbf16>, vector<128x64xbf16>, vector<8x128xf32> -> vector<8x128xf32>
    %c0_3 = arith.constant 0 : index
    %c0_4 = arith.constant 0 : index
    %c0_5 = arith.constant 0 : index
    %9 = vector.load %arg7[%c0_3, %c0_4, %c0_5] : memref<1x1x128xf32, #tpu.memory_space<vmem>>, vector<1x1x128xf32>
    %10 = vector.shape_cast %9 : vector<1x1x128xf32> to vector<1x128xf32>
    %11 = tpu.iota {dimensions = array<i32: 0>} : vector<8x128xi32>
    %12 = tpu.iota {dimensions = array<i32: 1>} : vector<8x128xi32>
    %13 = vector.broadcast %4 : i32 to vector<8x128xi32>
    %14 = arith.addi %12, %13 : vector<8x128xi32>
    %cst_6 = arith.constant 0.000000e+00 : f32
    %15 = vector.broadcast %cst_6 : f32 to vector<1x128xf32>
    %16 = arith.cmpf ogt, %10, %15 : vector<1x128xf32>
    %cst_7 = arith.constant -1.250000e+11 : f32
    %17 = vector.shape_cast %16 : vector<1x128xi1> to vector<1x128xi1>
    %18 = vector.broadcast %17 : vector<1x128xi1> to vector<8x128xi1>
    %19 = vector.broadcast %cst_7 : f32 to vector<8x128xf32>
    %20 = arith.select %18, %8, %19 : vector<8x128xi1>, vector<8x128xf32>
    %21 = arith.cmpi sgt, %11, %14 : vector<8x128xi32>
    %cst_8 = arith.constant -1.250000e+11 : f32
    %cst_9 = arith.constant 0.000000e+00 : f32
    %22 = vector.broadcast %cst_8 : f32 to vector<8x128xf32>
    %23 = vector.broadcast %cst_9 : f32 to vector<8x128xf32>
    %24 = arith.select %21, %22, %23 : vector<8x128xi1>, vector<8x128xf32>
    %25 = arith.addf %20, %24 : vector<8x128xf32>
    %c0_10 = arith.constant 0 : index
    %c0_11 = arith.constant 0 : index
    %c0_12 = arith.constant 0 : index
    %c0_13 = arith.constant 0 : index
    %26 = vector.load %arg8[%c0_10, %c0_11, %c0_12, %c0_13] : memref<1x1x8x128xf32, #tpu.memory_space<vmem>>, vector<1x1x8x128xf32>
    %27 = vector.shape_cast %26 : vector<1x1x8x128xf32> to vector<8x128xf32>
    %28 = vector.shape_cast %25 : vector<8x128xf32> to vector<1x1x8x128xf32>
    tpu.vector_store %arg8[%c0_10, %c0_11, %c0_12, %c0_13], %28 {strides = array<i32>} : memref<1x1x8x128xf32, #tpu.memory_space<vmem>>, vector<1x1x8x128xf32>,
    return
  }
  func.func @transform_0(%arg0: i32, %arg1: i32, %arg2: i32) -> (i32, i32, i32) {
    %c0_i32 = arith.constant 0 : i32
    %c0_i32_0 = arith.constant 0 : i32
    %c0_i32_1 = arith.constant 0 : i32
    return %arg0, %c0_i32, %c0_i32_0 : i32, i32, i32
  }
  func.func @transform_1(%arg0: i32, %arg1: i32, %arg2: i32) -> (i32, i32, i32) {
    %c0_i32 = arith.constant 0 : i32
    %c0_i32_0 = arith.constant 0 : i32
    %c0_i32_1 = arith.constant 0 : i32
    return %arg1, %c0_i32, %c0_i32_0 : i32, i32, i32
  }
  func.func @transform_2(%arg0: i32, %arg1: i32, %arg2: i32) -> (i32, i32, i32) {
    %c0_i32 = arith.constant 0 : i32
    %c0_i32_0 = arith.constant 0 : i32
    %c0_i32_1 = arith.constant 0 : i32
    return %arg1, %c0_i32, %c0_i32_0 : i32, i32, i32
  }
  func.func @transform_3(%arg0: i32, %arg1: i32, %arg2: i32) -> (i32, i32, i32) {
    %c0_i32 = arith.constant 0 : i32
    %c0_i32_0 = arith.constant 0 : i32
    %c0_i32_1 = arith.constant 0 : i32
    return %arg0, %c0_i32, %c0_i32_0 : i32, i32, i32
  }
  func.func @transform_4(%arg0: i32, %arg1: i32, %arg2: i32) -> (i32, i32, i32) {
    %c0_i32 = arith.constant 0 : i32
    %c0_i32_0 = arith.constant 0 : i32
    return %arg0, %c0_i32, %arg2 : i32, i32, i32
  }
  func.func @transform_5(%arg0: i32, %arg1: i32, %arg2: i32) -> (i32, i32, i32, i32) {
    %c0_i32 = arith.constant 0 : i32
    %c0_i32_0 = arith.constant 0 : i32
    return %arg0, %arg1, %c0_i32, %arg2 : i32, i32, i32, i32
  }
}

</mosaic_0001>

<llo_original>
// kernel: tpu_custom_call.1
$region0: #{tpu_custom_call.1}
  #allocation0 [shape = 'u32[]', space=smem, size = 0x4, offset = 0x4, fixed_abs, tag = 'smem constant byte address 0x4 - core index']
  #allocation1 [shape = 'u32[144,128]{1,0:T(1,128)}', space=vmem, size = 0x12000, scoped, tag = 'internal scratch']
  #allocation2 [shape = 'bf16[8,64]{1,0:T(8,128)(2,1)}', space=vmem, size = 0x800, scoped, tag = 'scratch operand']
  #allocation3 [shape = 'bf16[128,64]{1,0:T(16,128)(2,1)}', space=vmem, size = 0x8000, scoped, tag = 'scratch operand']
  %s0 = inlined_call_operand.vmem [shape: bf16[2,128,32], index: 0, kind: input, shape index: {}]
  %s1 = inlined_call_operand.vmem [shape: bf16[4,32,128], index: 1, kind: input, shape index: {}]
  %s2 = inlined_call_operand.vmem [shape: f32[4,1,128], index: 2, kind: input, shape index: {}]
  %s3 = inlined_call_operand.vmem [shape: f32[2,128,64], index: 3, kind: input, shape index: {}]
  %s4 = inlined_call_operand.vmem [shape: f32[2,1,128], index: 4, kind: input, shape index: {}]
  %s5 = inlined_call_operand.hbm [shape: f32[2,4,8,128], index: 5, kind: output, shape index: {}]
  %s6 = sld [smem:[#allocation0]]
  $region57: #{tpu_custom_call.1} parent=0
    _
  %s8 = ssub.s32 1, %s6
  %s9 = scalar_select 0, %s8, %s6
  $region1: #{tpu_custom_call.1} parent=0
    #allocation4 [shape = 'u8[8192]{0}', space=vmem, size = 0x2000, scoped, tag = 'output window, operand 0']
    #allocation5 [shape = 's32[2]{0}', space=sflag, size = 0x8, scoped, tag = 'scoped memory for tpu_custom_call.1']
    %10 = vsyncpa [#allocation5], 0
    %s11 = scalar_lea.sflag [#allocation5], 1
    %12 = vsyncpa %s11, 0
    loop: start=0, step=1, limit=10
    $region2: #{tpu_custom_call.1} parent=1 // loop_pre_header
      _
    $region3: #{tpu_custom_call.1} parent=1 // loop_header
      %s14 = sphi 0, %s18
      %p15 = scmp.ge.s32.totalorder %s14, 10
      %s21 = sphi 0, %s40
      %s22 = sphi 0, %s36
      %s23 = sphi 0, %s32
      %s24 = sphi 0, %s21
      %s25 = sphi 0, %s22
      %s26 = sphi 0, %s23
      %s27 = sphi 0, %s24
      %s28 = sphi 0, %s25
      %s29 = sphi 0, %s26
      %s43 = sphi 0, %s45
      %s46 = sphi 0, %s43
      %s47 = sphi 0, %s46
      %s63 = sphi 0, %s47
      %s69 = sphi 0, %s71
      %s72 = sphi 0, %s69
      %s73 = sphi 0, %s72
      %s89 = sphi 0, %s73
      %s95 = sphi 0, %s97
      %s98 = sphi 0, %s95
      %s99 = sphi 0, %s98
      %s115 = sphi 0, %s99
      %s121 = sphi 0, %s123
      %s124 = sphi 0, %s121
      %s125 = sphi 0, %s124
      %s141 = sphi 0, %s125
      %s149 = sphi 0, %s151
      %s152 = sphi 0, %s149
      %s153 = sphi 0, %s152
      %s169 = sphi 0, %s153
      %s179 = sphi 0, %s181
      %s182 = sphi 0, %s179
      %s183 = sphi 0, %s182
      %s199 = sphi 0, %s183
    $region4: #{tpu_custom_call.1} parent=1 // loop_header_branch
      %17 = sbr.rel (%p15) target = $region8
    $region5: #{tpu_custom_call.1} parent=1 // loop_body
      %s19 = ssub.s32 %s14, 1
      %s20 = ssub.s32 %s14, 2
      %s30 = sadd.s32 1, %s23
      %p31 = scmp.ge.s32.totalorder %s30, 1
      %s32 = scalar_select %p31, 0, %s30
      %s33 = sadd.s32 1, %s22
      %s34 = scalar_select %p31, %s33, %s22
      %p35 = scmp.ge.s32.totalorder %s34, 4
      %s36 = scalar_select %p35, 0, %s34
      %s37 = sadd.s32 1, %s21
      %s38 = scalar_select %p35, %s37, %s21
      %p39 = scmp.ge.s32.totalorder %s38, 2
      %s40 = scalar_select %p39, 0, %s38
      %s41 = ssub.s32 %s21, %s40
      %p42 = scmp.eq.s32.totalorder %s41, 0
      %s44 = sadd.s32 %s43, 1
      %s45 = scalar_select %p42, %s43, %s44
      %p48 = pneg %p42
      %p49 = scmp.eq.s32.totalorder %s14, 7
      %p50 = por %p48, %p49
      %p51 = scmp.ne.s32.totalorder %s43, %s46
      %p52 = scmp.eq.s32.totalorder %s14, 0
      %p53 = por %p51, %p52
      %p54 = scmp.ne.s32.totalorder %s43, %s46
      %p55 = scmp.eq.s32.totalorder %s19, 7
      %p56 = por %p54, %p55
      %p57 = scmp.ne.s32.totalorder %s46, %s47
      %p58 = scmp.eq.s32.totalorder %s19, 0
      %p59 = por %p57, %p58
      %p60 = scmp.ne.s32.totalorder %s46, %s47
      %p61 = scmp.eq.s32.totalorder %s20, 7
      %p62 = por %p60, %p61
      %p64 = scmp.ne.s32.totalorder %s47, %s63
      %p65 = scmp.eq.s32.totalorder %s20, 0
      %p66 = por %p64, %p65
      %s67 = ssub.s32 %s22, %s36
      %p68 = scmp.eq.s32.totalorder %s67, 0
      %s70 = sadd.s32 %s69, 1
      %s71 = scalar_select %p68, %s69, %s70
      %p74 = pneg %p68
      %p75 = scmp.eq.s32.totalorder %s14, 7
      %p76 = por %p74, %p75
      %p77 = scmp.ne.s32.totalorder %s69, %s72
      %p78 = scmp.eq.s32.totalorder %s14, 0
      %p79 = por %p77, %p78
      %p80 = scmp.ne.s32.totalorder %s69, %s72
      %p81 = scmp.eq.s32.totalorder %s19, 7
      %p82 = por %p80, %p81
      %p83 = scmp.ne.s32.totalorder %s72, %s73
      %p84 = scmp.eq.s32.totalorder %s19, 0
      %p85 = por %p83, %p84
      %p86 = scmp.ne.s32.totalorder %s72, %s73
      %p87 = scmp.eq.s32.totalorder %s20, 7
      %p88 = por %p86, %p87
      %p90 = scmp.ne.s32.totalorder %s73, %s89
      %p91 = scmp.eq.s32.totalorder %s20, 0
      %p92 = por %p90, %p91
      %s93 = ssub.s32 %s22, %s36
      %p94 = scmp.eq.s32.totalorder %s93, 0
      %s96 = sadd.s32 %s95, 1
      %s97 = scalar_select %p94, %s95, %s96
      %p100 = pneg %p94
      %p101 = scmp.eq.s32.totalorder %s14, 7
      %p102 = por %p100, %p101
      %p103 = scmp.ne.s32.totalorder %s95, %s98
      %p104 = scmp.eq.s32.totalorder %s14, 0
      %p105 = por %p103, %p104
      %p106 = scmp.ne.s32.totalorder %s95, %s98
      %p107 = scmp.eq.s32.totalorder %s19, 7
      %p108 = por %p106, %p107
      %p109 = scmp.ne.s32.totalorder %s98, %s99
      %p110 = scmp.eq.s32.totalorder %s19, 0
      %p111 = por %p109, %p110
      %p112 = scmp.ne.s32.totalorder %s98, %s99
      %p113 = scmp.eq.s32.totalorder %s20, 7
      %p114 = por %p112, %p113
      %p116 = scmp.ne.s32.totalorder %s99, %s115
      %p117 = scmp.eq.s32.totalorder %s20, 0
      %p118 = por %p116, %p117
      %s119 = ssub.s32 %s21, %s40
      %p120 = scmp.eq.s32.totalorder %s119, 0
      %s122 = sadd.s32 %s121, 1
      %s123 = scalar_select %p120, %s121, %s122
      %p126 = pneg %p120
      %p127 = scmp.eq.s32.totalorder %s14, 7
      %p128 = por %p126, %p127
      %p129 = scmp.ne.s32.totalorder %s121, %s124
      %p130 = scmp.eq.s32.totalorder %s14, 0
      %p131 = por %p129, %p130
      %p132 = scmp.ne.s32.totalorder %s121, %s124
      %p133 = scmp.eq.s32.totalorder %s19, 7
      %p134 = por %p132, %p133
      %p135 = scmp.ne.s32.totalorder %s124, %s125
      %p136 = scmp.eq.s32.totalorder %s19, 0
      %p137 = por %p135, %p136
      %p138 = scmp.ne.s32.totalorder %s124, %s125
      %p139 = scmp.eq.s32.totalorder %s20, 7
      %p140 = por %p138, %p139
      %p142 = scmp.ne.s32.totalorder %s125, %s141
      %p143 = scmp.eq.s32.totalorder %s20, 0
      %p144 = por %p142, %p143
      %s145 = ssub.s32 %s21, %s40
      %s146 = ssub.s32 %s23, %s32
      %s147 = sor.u32 %s145, %s146
      %p148 = scmp.eq.s32.totalorder %s147, 0
      %s150 = sadd.s32 %s149, 1
      %s151 = scalar_select %p148, %s149, %s150
      %p154 = pneg %p148
      %p155 = scmp.eq.s32.totalorder %s14, 7
      %p156 = por %p154, %p155
      %p157 = scmp.ne.s32.totalorder %s149, %s152
      %p158 = scmp.eq.s32.totalorder %s14, 0
      %p159 = por %p157, %p158
      %p160 = scmp.ne.s32.totalorder %s149, %s152
      %p161 = scmp.eq.s32.totalorder %s19, 7
      %p162 = por %p160, %p161
      %p163 = scmp.ne.s32.totalorder %s152, %s153
      %p164 = scmp.eq.s32.totalorder %s19, 0
      %p165 = por %p163, %p164
      %p166 = scmp.ne.s32.totalorder %s152, %s153
      %p167 = scmp.eq.s32.totalorder %s20, 7
      %p168 = por %p166, %p167
      %p170 = scmp.ne.s32.totalorder %s153, %s169
      %p171 = scmp.eq.s32.totalorder %s20, 0
      %p172 = por %p170, %p171
      %s173 = ssub.s32 %s21, %s40
      %s174 = ssub.s32 %s22, %s36
      %s175 = sor.u32 %s173, %s174
      %s176 = ssub.s32 %s23, %s32
      %s177 = sor.u32 %s175, %s176
      %p178 = scmp.eq.s32.totalorder %s177, 0
      %s180 = sadd.s32 %s179, 1
      %s181 = scalar_select %p178, %s179, %s180
      %p184 = pneg %p178
      %p185 = scmp.eq.s32.totalorder %s14, 7
      %p186 = por %p184, %p185
      %p187 = scmp.ne.s32.totalorder %s179, %s182
      %p188 = scmp.eq.s32.totalorder %s14, 0
      %p189 = por %p187, %p188
      %p190 = scmp.ne.s32.totalorder %s179, %s182
      %p191 = scmp.eq.s32.totalorder %s19, 7
      %p192 = por %p190, %p191
      %p193 = scmp.ne.s32.totalorder %s182, %s183
      %p194 = scmp.eq.s32.totalorder %s19, 0
      %p195 = por %p193, %p194
      %p196 = scmp.ne.s32.totalorder %s182, %s183
      %p197 = scmp.eq.s32.totalorder %s20, 7
      %p198 = por %p196, %p197
      %p200 = scmp.ne.s32.totalorder %s183, %s199
      %p201 = scmp.eq.s32.totalorder %s20, 0
      %p202 = por %p200, %p201
      %p203 = scmp.le.s32.totalorder 1, %s14
      %p204 = scmp.lt.s32.totalorder %s14, 9
      %p205 = pnand %p203, %p204
      %p206 = pneg %p205
      // Predicated region
      $region9: #{tpu_custom_call.1} parent=5 // pred_check
        _
      $region10: #{tpu_custom_call.1} parent=5 // pred_check_branch
        %208 = sbr.rel (%p205) target = $region12
      $region11: #{tpu_custom_call.1} parent=5 // pred_region
        %s209 = ssub.s32 %s14, 1
      $region12: #{tpu_custom_call.1} parent=5 // pred_fallthru
        _
      %p210 = scmp.lt.s32.totalorder %s14, 8
      // Predicated region
      $region13: #{tpu_custom_call.1} parent=5 // pred_check
        %p211 = pneg %p210
      $region14: #{tpu_custom_call.1} parent=5 // pred_check_branch
        %213 = sbr.rel (%p211) target = $region16
      $region15: #{tpu_custom_call.1} parent=5 // pred_region
        // Predicated region
        $region17: #{tpu_custom_call.1} parent=15 // pred_check
          %p214 = pneg %p53
        $region18: #{tpu_custom_call.1} parent=15 // pred_check_branch
          %216 = sbr.rel (%p214) target = $region20
        $region19: #{tpu_custom_call.1} parent=15 // pred_region
          %p217 = scmp.lt.s32.totalorder %s21, 1
          %s218 = scalar_select %p217, %s21, 1
          %s219 = smul.addr %s218, 16
          %s220 = smul.addr %s219, 4
          %s221 = scalar_lea.vmem %s0, %s220
        $region20: #{tpu_custom_call.1} parent=15 // pred_fallthru
          _
        // Predicated region
        $region21: #{tpu_custom_call.1} parent=15 // pred_check
          %p222 = pneg %p79
        $region22: #{tpu_custom_call.1} parent=15 // pred_check_branch
          %224 = sbr.rel (%p222) target = $region24
        $region23: #{tpu_custom_call.1} parent=15 // pred_region
          %p225 = scmp.lt.s32.totalorder %s22, 3
          %s226 = scalar_select %p225, %s22, 3
          %s227 = smul.addr %s226, 4
          %s228 = smul.addr %s227, 4
          %s229 = scalar_lea.vmem %s1, %s228
        $region24: #{tpu_custom_call.1} parent=15 // pred_fallthru
          _
        // Predicated region
        $region25: #{tpu_custom_call.1} parent=15 // pred_check
          %p230 = pneg %p105
        $region26: #{tpu_custom_call.1} parent=15 // pred_check_branch
          %232 = sbr.rel (%p230) target = $region28
        $region27: #{tpu_custom_call.1} parent=15 // pred_region
          %p233 = scmp.lt.s32.totalorder %s22, 3
          %s234 = scalar_select %p233, %s22, 3
          %s235 = scalar_lea.vmem %s2, %s234
        $region28: #{tpu_custom_call.1} parent=15 // pred_fallthru
          _
        // Predicated region
        $region29: #{tpu_custom_call.1} parent=15 // pred_check
          %p236 = pneg %p131
        $region30: #{tpu_custom_call.1} parent=15 // pred_check_branch
          %238 = sbr.rel (%p236) target = $region32
        $region31: #{tpu_custom_call.1} parent=15 // pred_region
          %p239 = scmp.lt.s32.totalorder %s21, 1
          %s240 = scalar_select %p239, %s21, 1
          %s241 = smul.addr %s240, 16
          %s242 = smul.addr %s241, 8
          %s243 = scalar_lea.vmem %s3, %s242
        $region32: #{tpu_custom_call.1} parent=15 // pred_fallthru
          _
        // Predicated region
        $region33: #{tpu_custom_call.1} parent=15 // pred_check
          %p244 = pneg %p159
        $region34: #{tpu_custom_call.1} parent=15 // pred_check_branch
          %246 = sbr.rel (%p244) target = $region36
        $region35: #{tpu_custom_call.1} parent=15 // pred_region
          %p247 = scmp.lt.s32.totalorder %s21, 1
          %s248 = scalar_select %p247, %s21, 1
          %p249 = scmp.lt.s32.totalorder %s23, 0
          %s250 = scalar_select %p249, %s23, 0
          %s251 = sadd.s32 %s250, %s248
          %s252 = scalar_lea.vmem %s4, %s251
        $region36: #{tpu_custom_call.1} parent=15 // pred_fallthru
          _
      $region16: #{tpu_custom_call.1} parent=5 // pred_fallthru
        _
      %p253 = scmp.le.s32.totalorder 1, %s14
      %p254 = scmp.lt.s32.totalorder %s14, 9
      %p255 = pnand %p253, %p254
      %p256 = pneg %p255
      // Predicated region
      $region37: #{tpu_custom_call.1} parent=5 // pred_check
        _
      $region38: #{tpu_custom_call.1} parent=5 // pred_check_branch
        %258 = sbr.rel (%p255) target = $region40
      $region39: #{tpu_custom_call.1} parent=5 // pred_region
        %s259 = ssub.s32 %s14, 1
        %p260 = scmp.lt.s32.totalorder %s24, 1
        %s261 = scalar_select %p260, %s24, 1
        %s262 = smul.addr %s261, 16
        %s263 = smul.addr %s262, 4
        %s264 = scalar_lea.vmem %s0, %s263
        %p265 = pneg %p59
        %p266 = pneg %p56
        %p267 = scmp.lt.s32.totalorder %s25, 3
        %s268 = scalar_select %p267, %s25, 3
        %s269 = smul.addr %s268, 4
        %s270 = smul.addr %s269, 4
        %s271 = scalar_lea.vmem %s1, %s270
        %p272 = pneg %p85
        %p273 = pneg %p82
        %p274 = scmp.lt.s32.totalorder %s25, 3
        %s275 = scalar_select %p274, %s25, 3
        %s276 = scalar_lea.vmem %s2, %s275
        %p277 = pneg %p111
        %p278 = pneg %p108
        %p279 = scmp.lt.s32.totalorder %s24, 1
        %s280 = scalar_select %p279, %s24, 1
        %s281 = smul.addr %s280, 16
        %s282 = smul.addr %s281, 8
        %s283 = scalar_lea.vmem %s3, %s282
        %p284 = pneg %p137
        %p285 = pneg %p134
        %p286 = scmp.lt.s32.totalorder %s24, 1
        %s287 = scalar_select %p286, %s24, 1
        %p288 = scmp.lt.s32.totalorder %s26, 0
        %s289 = scalar_select %p288, %s26, 0
        %s290 = sadd.s32 %s289, %s287
        %s291 = scalar_lea.vmem %s4, %s290
        %p292 = pneg %p165
        %p293 = pneg %p162
        %p294 = pneg %p195
        %p295 = pneg %p192
        %s296 = sand.u32 %s182, 1
        %s297 = scalar_lea.sflag [#allocation5], %s296
        %s298 = sand.u32 %s182, 1
        %s299 = smul.addr %s298, 8
        %s300 = scalar_lea.vmem [#allocation4], %s299
        %p301 = scmp.lt.s32.totalorder %s24, 1
        %s302 = scalar_select %p301, %s24, 1
        %s303 = smul.addr %s302, 16
        %s304 = smul.addr %s303, 4
        %s305 = scalar_lea.vmem %s0, %s304
        %p306 = scmp.lt.s32.totalorder %s25, 3
        %s307 = scalar_select %p306, %s25, 3
        %s308 = smul.addr %s307, 4
        %s309 = smul.addr %s308, 4
        %s310 = scalar_lea.vmem %s1, %s309
        %p311 = scmp.lt.s32.totalorder %s25, 3
        %s312 = scalar_select %p311, %s25, 3
        %s313 = scalar_lea.vmem %s2, %s312
        %p314 = scmp.lt.s32.totalorder %s24, 1
        %s315 = scalar_select %p314, %s24, 1
        %s316 = smul.addr %s315, 16
        %s317 = smul.addr %s316, 8
        %s318 = scalar_lea.vmem %s3, %s317
        %p319 = scmp.lt.s32.totalorder %s24, 1
        %s320 = scalar_select %p319, %s24, 1
        %p321 = scmp.lt.s32.totalorder %s26, 0
        %s322 = scalar_select %p321, %s26, 0
        %s323 = sadd.s32 %s322, %s320
        %s324 = scalar_lea.vmem %s4, %s323
        %p326 = scmp.eq.s32.totalorder %s26, 0
        // Predicated region
        $region41: #{tpu_custom_call.1} parent=39 // pred_check
          %p327 = pneg %p326
        $region42: #{tpu_custom_call.1} parent=39 // pred_check_branch
          %329 = sbr.rel (%p327) target = $region44
        $region43: #{tpu_custom_call.1} parent=39 // pred_region
          %v330 = vld [vmem:[%s305] sm:$0xf]
          %v331 = vld [vmem:[%s305 + $0x4] sm:$0xf]
          %v332 = vld [vmem:[%s305 + $0x8] sm:$0xf]
          %v333 = vld [vmem:[%s305 + $0xc] sm:$0xf]
          %v334 = vld [vmem:[%s305 + $0x10] sm:$0xf]
          %v335 = vld [vmem:[%s305 + $0x14] sm:$0xf]
          %v336 = vld [vmem:[%s305 + $0x18] sm:$0xf]
          %v337 = vld [vmem:[%s305 + $0x1c] sm:$0xf]
          %v338 = vld [vmem:[%s305 + $0x20] sm:$0xf]
          %v339 = vld [vmem:[%s305 + $0x24] sm:$0xf]
          %v340 = vld [vmem:[%s305 + $0x28] sm:$0xf]
          %v341 = vld [vmem:[%s305 + $0x2c] sm:$0xf]
          %v342 = vld [vmem:[%s305 + $0x30] sm:$0xf]
          %v343 = vld [vmem:[%s305 + $0x34] sm:$0xf]
          %v344 = vld [vmem:[%s305 + $0x38] sm:$0xf]
          %v345 = vld [vmem:[%s305 + $0x3c] sm:$0xf]
          %v346 = vld [vmem:[%s310] sm:$0xf]
          %v347 = vld [vmem:[%s310 + $0x4] sm:$0xf]
          %v348 = vld [vmem:[%s310 + $0x8] sm:$0xf]
          %v349 = vld [vmem:[%s310 + $0xc] sm:$0xf]
          %v350 = vld [vmem:[%s313] sm:$0x1]
          %v352 = vlaneseq
          %v353 = vshrl.u32 %v352, 7
          %v354 = vsub.s32 0, %v353
          %v355 = vrot.slane %v350, %v354
          %v373 = vunpack.c.l.b16 %v330
          %v374 = vunpack.c.l.b16 %v331
          %v375 = vunpack.c.l.b16 %v332
          %v376 = vunpack.c.l.b16 %v333
          %v377 = vunpack.c.l.b16 %v334
          %v378 = vunpack.c.l.b16 %v335
          %v379 = vunpack.c.l.b16 %v336
          %v380 = vunpack.c.l.b16 %v337
          %v381 = vunpack.c.l.b16 %v338
          %v382 = vunpack.c.l.b16 %v339
          %v383 = vunpack.c.l.b16 %v340
          %v384 = vunpack.c.l.b16 %v341
          %v385 = vunpack.c.l.b16 %v342
          %v386 = vunpack.c.l.b16 %v343
          %v387 = vunpack.c.l.b16 %v344
          %v388 = vunpack.c.l.b16 %v345
          %v389 = vpack.c.b16 %v374, %v373
          %v390 = vpack.c.b16 %v376, %v375
          %v391 = vpack.c.b16 %v378, %v377
          %v392 = vpack.c.b16 %v380, %v379
          %v393 = vpack.c.b16 %v382, %v381
          %v394 = vpack.c.b16 %v384, %v383
          %v395 = vpack.c.b16 %v386, %v385
          %v396 = vpack.c.b16 %v388, %v387
          %v401 = vunpack.c.l.b16 %v346
          %v402 = vunpack.c.l.b16 %v347
          %v403 = vunpack.c.l.b16 %v348
          %v404 = vunpack.c.l.b16 %v349
          %v405 = vpack.c.b16 %v402, %v401
          %v406 = vpack.c.b16 %v404, %v403
          %vm409 = vcmask 261120
          %v411 = vsel %vm409, %v389, 0
          %v414 = vsel %vm409, %v390, 0
          %v417 = vsel %vm409, %v391, 0
          %v420 = vsel %vm409, %v392, 0
          %v423 = vsel %vm409, %v393, 0
          %v426 = vsel %vm409, %v394, 0
          %v429 = vsel %vm409, %v395, 0
          %v432 = vsel %vm409, %v396, 0
          %434 = vmatprep.subr.bf16.mxu0 0
          %435 = vmatpush1.bf16.msra.mxu0 %v405
          %436 = vmatprep.subr.bf16.mxu0 0
          %437 = vmatpush1.bf16.msra.mxu0 %v406
          %438 = vmatprep.subr.bf16.mxu0 0
          %439 = vmatpush1.bf16.msra.mxu0 0
          %440 = vmatprep.subr.bf16.mxu0 0
          %441 = vmatpush1.bf16.msra.mxu0 0
          %442 = vmatprep.subr.bf16.mxu0 0
          %443 = vmatpush1.bf16.msra.mxu0 0
          %444 = vmatprep.subr.bf16.mxu0 0
          %445 = vmatpush1.bf16.msra.mxu0 0
          %446 = vmatprep.subr.bf16.mxu0 0
          %447 = vmatpush1.bf16.msra.mxu0 0
          %448 = vmatprep.subr.bf16.mxu0 0
          %449 = vmatpush1.bf16.msra.mxu0 0
          %450 = vmatprep.subr.bf16.mxu0 0
          %451 = vmatpush1.bf16.msra.mxu0 0
          %452 = vmatprep.subr.bf16.mxu0 0
          %453 = vmatpush1.bf16.msra.mxu0 0
          %454 = vmatprep.subr.bf16.mxu0 0
          %455 = vmatpush1.bf16.msra.mxu0 0
          %456 = vmatprep.subr.bf16.mxu0 0
          %457 = vmatpush1.bf16.msra.mxu0 0
          %458 = vmatprep.subr.bf16.mxu0 0
          %459 = vmatpush1.bf16.msra.mxu0 0
          %460 = vmatprep.subr.bf16.mxu0 0
          %461 = vmatpush1.bf16.msra.mxu0 0
          %462 = vmatprep.subr.bf16.mxu0 0
          %463 = vmatpush1.bf16.msra.mxu0 0
          %464 = vmatprep.subr.bf16.mxu0 0
          %465 = vmatpush1.bf16.msra.mxu0 0
          %466 = vmatprep.mubr.bf16.mxu0 0
          %467 = vmatmul.mubr.bf16.gmra.mrb[0].mxu0 %v411
          %v468 = vpop.f32.mrb[0].mxu0
          %v469 = vadd.f32 %v355, %v468
          %v470 = vpop.f32.mrb[0].mxu0
          %v471 = vpop.f32.mrb[0].mxu0
          %v472 = vadd.f32 %v355, %v471
          %v473 = vpop.f32.mrb[0].mxu0
          %474 = vmatprep.mubr.bf16.mxu0 0
          %475 = vmatmul.mubr.bf16.gmra.mrb[0].mxu0 %v414
          %v476 = vpop.f32.mrb[0].mxu0
          %v477 = vadd.f32 %v355, %v476
          %v478 = vpop.f32.mrb[0].mxu0
          %v479 = vpop.f32.mrb[0].mxu0
          %v480 = vadd.f32 %v355, %v479
          %v481 = vpop.f32.mrb[0].mxu0
          %482 = vmatprep.mubr.bf16.mxu0 0
          %483 = vmatmul.mubr.bf16.gmra.mrb[0].mxu0 %v417
          %v484 = vpop.f32.mrb[0].mxu0
          %v485 = vadd.f32 %v355, %v484
          %v486 = vpop.f32.mrb[0].mxu0
          %v487 = vpop.f32.mrb[0].mxu0
          %v488 = vadd.f32 %v355, %v487
          %v489 = vpop.f32.mrb[0].mxu0
          %490 = vmatprep.mubr.bf16.mxu0 0
          %491 = vmatmul.mubr.bf16.gmra.mrb[0].mxu0 %v420
          %v492 = vpop.f32.mrb[0].mxu0
          %v493 = vadd.f32 %v355, %v492
          %v494 = vpop.f32.mrb[0].mxu0
          %v495 = vpop.f32.mrb[0].mxu0
          %v496 = vadd.f32 %v355, %v495
          %v497 = vpop.f32.mrb[0].mxu0
          %498 = vmatprep.mubr.bf16.mxu0 0
          %499 = vmatmul.mubr.bf16.gmra.mrb[0].mxu0 %v423
          %v500 = vpop.f32.mrb[0].mxu0
          %v501 = vadd.f32 %v355, %v500
          %v502 = vpop.f32.mrb[0].mxu0
          %v503 = vpop.f32.mrb[0].mxu0
          %v504 = vadd.f32 %v355, %v503
          %v505 = vpop.f32.mrb[0].mxu0
          %506 = vmatprep.mubr.bf16.mxu0 0
          %507 = vmatmul.mubr.bf16.gmra.mrb[0].mxu0 %v426
          %v508 = vpop.f32.mrb[0].mxu0
          %v509 = vadd.f32 %v355, %v508
          %v510 = vpop.f32.mrb[0].mxu0
          %v511 = vpop.f32.mrb[0].mxu0
          %v512 = vadd.f32 %v355, %v511
          %v513 = vpop.f32.mrb[0].mxu0
          %514 = vmatprep.mubr.bf16.mxu0 0
          %515 = vmatmul.mubr.bf16.gmra.mrb[0].mxu0 %v429
          %v516 = vpop.f32.mrb[0].mxu0
          %v517 = vadd.f32 %v355, %v516
          %v518 = vpop.f32.mrb[0].mxu0
          %v519 = vpop.f32.mrb[0].mxu0
          %v520 = vadd.f32 %v355, %v519
          %v521 = vpop.f32.mrb[0].mxu0
          %522 = vmatprep.mubr.bf16.mxu0 0
          %523 = vmatmul.mubr.bf16.gmra.mrb[0].mxu0 %v432
          %v524 = vpop.f32.mrb[0].mxu0
          %v525 = vadd.f32 %v355, %v524
          %v526 = vpop.f32.mrb[0].mxu0
          %v527 = vpop.f32.mrb[0].mxu0
          %v528 = vadd.f32 %v355, %v527
          %v529 = vpop.f32.mrb[0].mxu0
          %530 = vdwg.mxu0
          %v531 = vld [vmem:[%s318] sm:$0xff]
          %v532 = vld [vmem:[%s318 + $0x8] sm:$0xff]
          %v533 = vld [vmem:[%s318 + $0x10] sm:$0xff]
          %v534 = vld [vmem:[%s318 + $0x18] sm:$0xff]
          %v535 = vld [vmem:[%s318 + $0x20] sm:$0xff]
          %v536 = vld [vmem:[%s318 + $0x28] sm:$0xff]
          %v537 = vld [vmem:[%s318 + $0x30] sm:$0xff]
          %v538 = vld [vmem:[%s318 + $0x38] sm:$0xff]
          %v539 = vld [vmem:[%s318 + $0x40] sm:$0xff]
          %v540 = vld [vmem:[%s318 + $0x48] sm:$0xff]
          %v541 = vld [vmem:[%s318 + $0x50] sm:$0xff]
          %v542 = vld [vmem:[%s318 + $0x58] sm:$0xff]
          %v543 = vld [vmem:[%s318 + $0x60] sm:$0xff]
          %v544 = vld [vmem:[%s318 + $0x68] sm:$0xff]
          %v545 = vld [vmem:[%s318 + $0x70] sm:$0xff]
          %v546 = vld [vmem:[%s318 + $0x78] sm:$0xff]
          %v547 = vmul.f32 %v469, %v531
          %549 = vrot.lane.b32.xlu0 %v547, 96
          %v550 = vpop.permute.xlu0 %549
          %v552 = vsub.f32 %v547, %v550
          %554 = vrot.lane.b32.xlu0 %v531, 32
          %v555 = vpop.permute.xlu0 %554
          %v557 = vmul.f32 %v469, %v555
          %558 = vrot.lane.b32.xlu0 %v531, 96
          %v559 = vpop.permute.xlu0 %558
          %v561 = vmul.f32 %v469, %v559
          %563 = vrot.lane.b32.xlu0 %v561, 32
          %v564 = vpop.permute.xlu0 %563
          %v566 = vadd.f32 %v557, %v564
          %v567 = vsel %vm409, %v552, %v566
          %583 = vrot.lane.b32.xlu0 %v531, 64
          %v584 = vpop.permute.xlu0 %583
          %585 = vrot.lane.b32.xlu0 %v532, 64
          %v586 = vpop.permute.xlu0 %585
          %587 = vrot.lane.b32.xlu0 %v533, 64
          %v588 = vpop.permute.xlu0 %587
          %589 = vrot.lane.b32.xlu0 %v534, 64
          %v590 = vpop.permute.xlu0 %589
          %591 = vrot.lane.b32.xlu0 %v535, 64
          %v592 = vpop.permute.xlu0 %591
          %593 = vrot.lane.b32.xlu0 %v536, 64
          %v594 = vpop.permute.xlu0 %593
          %595 = vrot.lane.b32.xlu0 %v537, 64
          %v596 = vpop.permute.xlu0 %595
          %597 = vrot.lane.b32.xlu0 %v538, 64
          %v598 = vpop.permute.xlu0 %597
          %599 = vrot.lane.b32.xlu0 %v539, 64
          %v600 = vpop.permute.xlu0 %599
          %601 = vrot.lane.b32.xlu0 %v540, 64
          %v602 = vpop.permute.xlu0 %601
          %603 = vrot.lane.b32.xlu0 %v541, 64
          %v604 = vpop.permute.xlu0 %603
          %605 = vrot.lane.b32.xlu0 %v542, 64
          %v606 = vpop.permute.xlu0 %605
          %607 = vrot.lane.b32.xlu0 %v543, 64
          %v608 = vpop.permute.xlu0 %607
          %609 = vrot.lane.b32.xlu0 %v544, 64
          %v610 = vpop.permute.xlu0 %609
          %611 = vrot.lane.b32.xlu0 %v545, 64
          %v612 = vpop.permute.xlu0 %611
          %613 = vrot.lane.b32.xlu0 %v546, 64
          %v614 = vpop.permute.xlu0 %613
          %v631 = vmul.f32 %v469, %v584
          %v632 = vmul.f32 %v472, %v586
          %v633 = vmul.f32 %v477, %v588
          %v634 = vmul.f32 %v480, %v590
          %v635 = vmul.f32 %v485, %v592
          %v636 = vmul.f32 %v488, %v594
          %v637 = vmul.f32 %v493, %v596
          %v638 = vmul.f32 %v496, %v598
          %v639 = vmul.f32 %v501, %v600
          %v640 = vmul.f32 %v504, %v602
          %v641 = vmul.f32 %v509, %v604
          %v642 = vmul.f32 %v512, %v606
          %v643 = vmul.f32 %v517, %v608
          %v644 = vmul.f32 %v520, %v610
          %v645 = vmul.f32 %v525, %v612
          %v646 = vmul.f32 %v528, %v614
          %663 = vrot.lane.b32.xlu0 %v631, 96
          %v664 = vpop.permute.xlu0 %663
          %665 = vrot.lane.b32.xlu0 %v632, 96
          %v666 = vpop.permute.xlu0 %665
          %667 = vrot.lane.b32.xlu0 %v633, 96
          %v668 = vpop.permute.xlu0 %667
          %669 = vrot.lane.b32.xlu0 %v634, 96
          %v670 = vpop.permute.xlu0 %669
          %671 = vrot.lane.b32.xlu0 %v635, 96
          %v672 = vpop.permute.xlu0 %671
          %673 = vrot.lane.b32.xlu0 %v636, 96
          %v674 = vpop.permute.xlu0 %673
          %675 = vrot.lane.b32.xlu0 %v637, 96
          %v676 = vpop.permute.xlu0 %675
          %677 = vrot.lane.b32.xlu0 %v638, 96
          %v678 = vpop.permute.xlu0 %677
          %679 = vrot.lane.b32.xlu0 %v639, 96
          %v680 = vpop.permute.xlu0 %679
          %681 = vrot.lane.b32.xlu0 %v640, 96
          %v682 = vpop.permute.xlu0 %681
          %683 = vrot.lane.b32.xlu0 %v641, 96
          %v684 = vpop.permute.xlu0 %683
          %685 = vrot.lane.b32.xlu0 %v642, 96
          %v686 = vpop.permute.xlu0 %685
          %687 = vrot.lane.b32.xlu0 %v643, 96
          %v688 = vpop.permute.xlu0 %687
          %689 = vrot.lane.b32.xlu0 %v644, 96
          %v690 = vpop.permute.xlu0 %689
          %691 = vrot.lane.b32.xlu0 %v645, 96
          %v692 = vpop.permute.xlu0 %691
          %693 = vrot.lane.b32.xlu0 %v646, 96
          %v694 = vpop.permute.xlu0 %693
          %v711 = vsub.f32 %v631, %v664
          %v712 = vsub.f32 %v632, %v666
          %v713 = vsub.f32 %v633, %v668
          %v714 = vsub.f32 %v634, %v670
          %v715 = vsub.f32 %v635, %v672
          %v716 = vsub.f32 %v636, %v674
          %v717 = vsub.f32 %v637, %v676
          %v718 = vsub.f32 %v638, %v678
          %v719 = vsub.f32 %v639, %v680
          %v720 = vsub.f32 %v640, %v682
          %v721 = vsub.f32 %v641, %v684
          %v722 = vsub.f32 %v642, %v686
          %v723 = vsub.f32 %v643, %v688
          %v724 = vsub.f32 %v644, %v690
          %v725 = vsub.f32 %v645, %v692
          %v726 = vsub.f32 %v646, %v694
          %727 = vrot.lane.b32.xlu0 %v532, 96
          %v728 = vpop.permute.xlu0 %727
          %729 = vrot.lane.b32.xlu0 %v533, 96
          %v730 = vpop.permute.xlu0 %729
          %731 = vrot.lane.b32.xlu0 %v534, 96
          %v732 = vpop.permute.xlu0 %731
          %733 = vrot.lane.b32.xlu0 %v535, 96
          %v734 = vpop.permute.xlu0 %733
          %735 = vrot.lane.b32.xlu0 %v536, 96
          %v736 = vpop.permute.xlu0 %735
          %737 = vrot.lane.b32.xlu0 %v537, 96
          %v738 = vpop.permute.xlu0 %737
          %739 = vrot.lane.b32.xlu0 %v538, 96
          %v740 = vpop.permute.xlu0 %739
          %741 = vrot.lane.b32.xlu0 %v539, 96
          %v742 = vpop.permute.xlu0 %741
          %743 = vrot.lane.b32.xlu0 %v540, 96
          %v744 = vpop.permute.xlu0 %743
          %745 = vrot.lane.b32.xlu0 %v541, 96
          %v746 = vpop.permute.xlu0 %745
          %747 = vrot.lane.b32.xlu0 %v542, 96
          %v748 = vpop.permute.xlu0 %747
          %749 = vrot.lane.b32.xlu0 %v543, 96
          %v750 = vpop.permute.xlu0 %749
          %751 = vrot.lane.b32.xlu0 %v544, 96
          %v752 = vpop.permute.xlu0 %751
          %753 = vrot.lane.b32.xlu0 %v545, 96
          %v754 = vpop.permute.xlu0 %753
          %755 = vrot.lane.b32.xlu0 %v546, 96
          %v756 = vpop.permute.xlu0 %755
          %v772 = vmul.f32 %v472, %v728
          %v773 = vmul.f32 %v477, %v730
          %v774 = vmul.f32 %v480, %v732
          %v775 = vmul.f32 %v485, %v734
          %v776 = vmul.f32 %v488, %v736
          %v777 = vmul.f32 %v493, %v738
          %v778 = vmul.f32 %v496, %v740
          %v779 = vmul.f32 %v501, %v742
          %v780 = vmul.f32 %v504, %v744
          %v781 = vmul.f32 %v509, %v746
          %v782 = vmul.f32 %v512, %v748
          %v783 = vmul.f32 %v517, %v750
          %v784 = vmul.f32 %v520, %v752
          %v785 = vmul.f32 %v525, %v754
          %v786 = vmul.f32 %v528, %v756
          %787 = vrot.lane.b32.xlu0 %v532, 32
          %v788 = vpop.permute.xlu0 %787
          %789 = vrot.lane.b32.xlu0 %v533, 32
          %v790 = vpop.permute.xlu0 %789
          %791 = vrot.lane.b32.xlu0 %v534, 32
          %v792 = vpop.permute.xlu0 %791
          %793 = vrot.lane.b32.xlu0 %v535, 32
          %v794 = vpop.permute.xlu0 %793
          %795 = vrot.lane.b32.xlu0 %v536, 32
          %v796 = vpop.permute.xlu0 %795
          %797 = vrot.lane.b32.xlu0 %v537, 32
          %v798 = vpop.permute.xlu0 %797
          %799 = vrot.lane.b32.xlu0 %v538, 32
          %v800 = vpop.permute.xlu0 %799
          %801 = vrot.lane.b32.xlu0 %v539, 32
          %v802 = vpop.permute.xlu0 %801
          %803 = vrot.lane.b32.xlu0 %v540, 32
          %v804 = vpop.permute.xlu0 %803
          %805 = vrot.lane.b32.xlu0 %v541, 32
          %v806 = vpop.permute.xlu0 %805
          %807 = vrot.lane.b32.xlu0 %v542, 32
          %v808 = vpop.permute.xlu0 %807
          %809 = vrot.lane.b32.xlu0 %v543, 32
          %v810 = vpop.permute.xlu0 %809
          %811 = vrot.lane.b32.xlu0 %v544, 32
          %v812 = vpop.permute.xlu0 %811
          %813 = vrot.lane.b32.xlu0 %v545, 32
          %v814 = vpop.permute.xlu0 %813
          %815 = vrot.lane.b32.xlu0 %v546, 32
          %v816 = vpop.permute.xlu0 %815
          %v832 = vmul.f32 %v472, %v788
          %v833 = vmul.f32 %v477, %v790
          %v834 = vmul.f32 %v480, %v792
          %v835 = vmul.f32 %v485, %v794
          %v836 = vmul.f32 %v488, %v796
          %v837 = vmul.f32 %v493, %v798
          %v838 = vmul.f32 %v496, %v800
          %v839 = vmul.f32 %v501, %v802
          %v840 = vmul.f32 %v504, %v804
          %v841 = vmul.f32 %v509, %v806
          %v842 = vmul.f32 %v512, %v808
          %v843 = vmul.f32 %v517, %v810
          %v844 = vmul.f32 %v520, %v812
          %v845 = vmul.f32 %v525, %v814
          %v846 = vmul.f32 %v528, %v816
          %863 = vrot.lane.b32.xlu0 %v557, 32
          %v864 = vpop.permute.xlu0 %863
          %865 = vrot.lane.b32.xlu0 %v832, 32
          %v866 = vpop.permute.xlu0 %865
          %867 = vrot.lane.b32.xlu0 %v833, 32
          %v868 = vpop.permute.xlu0 %867
          %869 = vrot.lane.b32.xlu0 %v834, 32
          %v870 = vpop.permute.xlu0 %869
          %871 = vrot.lane.b32.xlu0 %v835, 32
          %v872 = vpop.permute.xlu0 %871
          %873 = vrot.lane.b32.xlu0 %v836, 32
          %v874 = vpop.permute.xlu0 %873
          %875 = vrot.lane.b32.xlu0 %v837, 32
          %v876 = vpop.permute.xlu0 %875
          %877 = vrot.lane.b32.xlu0 %v838, 32
          %v878 = vpop.permute.xlu0 %877
          %879 = vrot.lane.b32.xlu0 %v839, 32
          %v880 = vpop.permute.xlu0 %879
          %881 = vrot.lane.b32.xlu0 %v840, 32
          %v882 = vpop.permute.xlu0 %881
          %883 = vrot.lane.b32.xlu0 %v841, 32
          %v884 = vpop.permute.xlu0 %883
          %885 = vrot.lane.b32.xlu0 %v842, 32
          %v886 = vpop.permute.xlu0 %885
          %887 = vrot.lane.b32.xlu0 %v843, 32
          %v888 = vpop.permute.xlu0 %887
          %889 = vrot.lane.b32.xlu0 %v844, 32
          %v890 = vpop.permute.xlu0 %889
          %891 = vrot.lane.b32.xlu0 %v845, 32
          %v892 = vpop.permute.xlu0 %891
          %893 = vrot.lane.b32.xlu0 %v846, 32
          %v894 = vpop.permute.xlu0 %893
          %v911 = vadd.f32 %v561, %v864
          %v912 = vadd.f32 %v772, %v866
          %v913 = vadd.f32 %v773, %v868
          %v914 = vadd.f32 %v774, %v870
          %v915 = vadd.f32 %v775, %v872
          %v916 = vadd.f32 %v776, %v874
          %v917 = vadd.f32 %v777, %v876
          %v918 = vadd.f32 %v778, %v878
          %v919 = vadd.f32 %v779, %v880
          %v920 = vadd.f32 %v780, %v882
          %v921 = vadd.f32 %v781, %v884
          %v922 = vadd.f32 %v782, %v886
          %v923 = vadd.f32 %v783, %v888
          %v924 = vadd.f32 %v784, %v890
          %v925 = vadd.f32 %v785, %v892
          %v926 = vadd.f32 %v786, %v894
          %943 = vrot.lane.b32.xlu0 %v711, 64
          %v944 = vpop.permute.xlu0 %943
          %945 = vrot.lane.b32.xlu0 %v712, 64
          %v946 = vpop.permute.xlu0 %945
          %947 = vrot.lane.b32.xlu0 %v713, 64
          %v948 = vpop.permute.xlu0 %947
          %949 = vrot.lane.b32.xlu0 %v714, 64
          %v950 = vpop.permute.xlu0 %949
          %951 = vrot.lane.b32.xlu0 %v715, 64
          %v952 = vpop.permute.xlu0 %951
          %953 = vrot.lane.b32.xlu0 %v716, 64
          %v954 = vpop.permute.xlu0 %953
          %955 = vrot.lane.b32.xlu0 %v717, 64
          %v956 = vpop.permute.xlu0 %955
          %957 = vrot.lane.b32.xlu0 %v718, 64
          %v958 = vpop.permute.xlu0 %957
          %959 = vrot.lane.b32.xlu0 %v719, 64
          %v960 = vpop.permute.xlu0 %959
          %961 = vrot.lane.b32.xlu0 %v720, 64
          %v962 = vpop.permute.xlu0 %961
          %963 = vrot.lane.b32.xlu0 %v721, 64
          %v964 = vpop.permute.xlu0 %963
          %965 = vrot.lane.b32.xlu0 %v722, 64
          %v966 = vpop.permute.xlu0 %965
          %967 = vrot.lane.b32.xlu0 %v723, 64
          %v968 = vpop.permute.xlu0 %967
          %969 = vrot.lane.b32.xlu0 %v724, 64
          %v970 = vpop.permute.xlu0 %969
          %971 = vrot.lane.b32.xlu0 %v725, 64
          %v972 = vpop.permute.xlu0 %971
          %973 = vrot.lane.b32.xlu0 %v726, 64
          %v974 = vpop.permute.xlu0 %973
          %1007 = vrot.lane.b32.xlu0 %v911, 64
          %v1008 = vpop.permute.xlu0 %1007
          %1009 = vrot.lane.b32.xlu0 %v912, 64
          %v1010 = vpop.permute.xlu0 %1009
          %1011 = vrot.lane.b32.xlu0 %v913, 64
          %v1012 = vpop.permute.xlu0 %1011
          %1013 = vrot.lane.b32.xlu0 %v914, 64
          %v1014 = vpop.permute.xlu0 %1013
          %1015 = vrot.lane.b32.xlu0 %v915, 64
          %v1016 = vpop.permute.xlu0 %1015
          %1017 = vrot.lane.b32.xlu0 %v916, 64
          %v1018 = vpop.permute.xlu0 %1017
          %1019 = vrot.lane.b32.xlu0 %v917, 64
          %v1020 = vpop.permute.xlu0 %1019
          %1021 = vrot.lane.b32.xlu0 %v918, 64
          %v1022 = vpop.permute.xlu0 %1021
          %1023 = vrot.lane.b32.xlu0 %v919, 64
          %v1024 = vpop.permute.xlu0 %1023
          %1025 = vrot.lane.b32.xlu0 %v920, 64
          %v1026 = vpop.permute.xlu0 %1025
          %1027 = vrot.lane.b32.xlu0 %v921, 64
          %v1028 = vpop.permute.xlu0 %1027
          %1029 = vrot.lane.b32.xlu0 %v922, 64
          %v1030 = vpop.permute.xlu0 %1029
          %1031 = vrot.lane.b32.xlu0 %v923, 64
          %v1032 = vpop.permute.xlu0 %1031
          %1033 = vrot.lane.b32.xlu0 %v924, 64
          %v1034 = vpop.permute.xlu0 %1033
          %1035 = vrot.lane.b32.xlu0 %v925, 64
          %v1036 = vpop.permute.xlu0 %1035
          %1037 = vrot.lane.b32.xlu0 %v926, 64
          %v1038 = vpop.permute.xlu0 %1037
          %v1055 = vsel %vm409, %v944, %v1008
          %v1056 = vsel %vm409, %v946, %v1010
          %v1057 = vsel %vm409, %v948, %v1012
          %v1058 = vsel %vm409, %v950, %v1014
          %v1059 = vsel %vm409, %v952, %v1016
          %v1060 = vsel %vm409, %v954, %v1018
          %v1061 = vsel %vm409, %v956, %v1020
          %v1062 = vsel %vm409, %v958, %v1022
          %v1063 = vsel %vm409, %v960, %v1024
          %v1064 = vsel %vm409, %v962, %v1026
          %v1065 = vsel %vm409, %v964, %v1028
          %v1066 = vsel %vm409, %v966, %v1030
          %v1067 = vsel %vm409, %v968, %v1032
          %v1068 = vsel %vm409, %v970, %v1034
          %v1069 = vsel %vm409, %v972, %v1036
          %v1070 = vsel %vm409, %v974, %v1038
          %v1071 = vpack.c.bf16 %v567, %v567
          %vm1072 = vcmask 519168
          %1073 = vst.msk [vmem:[#allocation2] sm:$0xf] %vm1072, %v1071
          %v1074 = vpack.c.bf16 %v1056, %v1055
          %v1075 = vpack.c.bf16 %v1058, %v1057
          %v1076 = vpack.c.bf16 %v1060, %v1059
          %v1077 = vpack.c.bf16 %v1062, %v1061
          %v1078 = vpack.c.bf16 %v1064, %v1063
          %v1079 = vpack.c.bf16 %v1066, %v1065
          %v1080 = vpack.c.bf16 %v1068, %v1067
          %v1081 = vpack.c.bf16 %v1070, %v1069
          %vm1082 = vcmask 523264
          %1083 = vst.msk [vmem:[#allocation3] sm:$0xff] %vm1082, %v1074
          %1084 = vst.msk [vmem:[#allocation3 + $0x8] sm:$0xff] %vm1082, %v1075
          %1085 = vst.msk [vmem:[#allocation3 + $0x10] sm:$0xff] %vm1082, %v1076
          %1086 = vst.msk [vmem:[#allocation3 + $0x18] sm:$0xff] %vm1082, %v1077
          %1087 = vst.msk [vmem:[#allocation3 + $0x20] sm:$0xff] %vm1082, %v1078
          %1088 = vst.msk [vmem:[#allocation3 + $0x28] sm:$0xff] %vm1082, %v1079
          %1089 = vst.msk [vmem:[#allocation3 + $0x30] sm:$0xff] %vm1082, %v1080
          %1090 = vst.msk [vmem:[#allocation3 + $0x38] sm:$0xff] %vm1082, %v1081
        $region44: #{tpu_custom_call.1} parent=39 // pred_fallthru
          _
        %s1091 = smul.u32 %s26, 128
        %s1092 = sshra.s32 %s1091, 4
        %s1093 = sand.u32 %s1091, 15
        %s1094 = smul.addr %s1092, 8
        %s1095 = scalar_lea.vmem [#allocation3], %s1094
        %v1096 = vld [vmem:[%s1095] sm:$0xff]
        %v1097 = vld [vmem:[%s1095 + $0x8] sm:$0xff]
        %v1098 = vld [vmem:[%s1095 + $0x10] sm:$0xff]
        %v1099 = vld [vmem:[%s1095 + $0x18] sm:$0xff]
        %v1100 = vld [vmem:[%s1095 + $0x20] sm:$0xff]
        %v1101 = vld [vmem:[%s1095 + $0x28] sm:$0xff]
        %v1102 = vld [vmem:[%s1095 + $0x30] sm:$0xff]
        %v1103 = vld [vmem:[%s1095 + $0x38] sm:$0xff]
        %v1104 = vld [vmem:[#allocation2] sm:$0xf]
        %vm1105 = vcmask 523264
        %v1107 = vsel %vm1105, %v1104, 0
        %v1110 = vsel %vm1105, %v1096, 0
        %v1113 = vsel %vm1105, %v1097, 0
        %v1116 = vsel %vm1105, %v1098, 0
        %v1119 = vsel %vm1105, %v1099, 0
        %v1122 = vsel %vm1105, %v1100, 0
        %v1125 = vsel %vm1105, %v1101, 0
        %v1128 = vsel %vm1105, %v1102, 0
        %v1131 = vsel %vm1105, %v1103, 0
        %1133 = vmatprep.subr.bf16.mxu0 0
        %1134 = vmatpush1.bf16.xpose.msra.mxu0 %v1110
        %1135 = vmatprep.subr.bf16.mxu0 0
        %1136 = vmatpush1.bf16.xpose.msra.mxu0 %v1113
        %1137 = vmatprep.subr.bf16.mxu0 0
        %1138 = vmatpush1.bf16.xpose.msra.mxu0 %v1116
        %1139 = vmatprep.subr.bf16.mxu0 0
        %1140 = vmatpush1.bf16.xpose.msra.mxu0 %v1119
        %1141 = vmatprep.subr.bf16.mxu0 0
        %1142 = vmatpush1.bf16.xpose.msra.mxu0 %v1122
        %1143 = vmatprep.subr.bf16.mxu0 0
        %1144 = vmatpush1.bf16.xpose.msra.mxu0 %v1125
        %1145 = vmatprep.subr.bf16.mxu0 0
        %1146 = vmatpush1.bf16.xpose.msra.mxu0 %v1128
        %1147 = vmatprep.subr.bf16.mxu0 0
        %1148 = vmatpush1.bf16.xpose.msra.mxu0 %v1131
        %1149 = vmatprep.subr.bf16.mxu0 0
        %1150 = vmatpush1.bf16.xpose.msra.mxu0 0
        %1151 = vmatprep.subr.bf16.mxu0 0
        %1152 = vmatpush1.bf16.xpose.msra.mxu0 0
        %1153 = vmatprep.subr.bf16.mxu0 0
        %1154 = vmatpush1.bf16.xpose.msra.mxu0 0
        %1155 = vmatprep.subr.bf16.mxu0 0
        %1156 = vmatpush1.bf16.xpose.msra.mxu0 0
        %1157 = vmatprep.subr.bf16.mxu0 0
        %1158 = vmatpush1.bf16.xpose.msra.mxu0 0
        %1159 = vmatprep.subr.bf16.mxu0 0
        %1160 = vmatpush1.bf16.xpose.msra.mxu0 0
        %1161 = vmatprep.subr.bf16.mxu0 0
        %1162 = vmatpush1.bf16.xpose.msra.mxu0 0
        %1163 = vmatprep.subr.bf16.mxu0 0
        %1164 = vmatpush1.bf16.xpose.msra.mxu0 0
        %1165 = vmatprep.mubr.bf16.mxu0 0
        %1166 = vmatmul.mubr.bf16.gmra.mrb[0].mxu0 %v1107
        %v1167 = vpop.f32.mrb[0].mxu0
        %v1168 = vadd.f32 0.0, %v1167
        %v1169 = vpop.f32.mrb[0].mxu0
        %v1170 = vpop.f32.mrb[0].mxu0
        %v1171 = vpop.f32.mrb[0].mxu0
        %1172 = vdwg.mxu0
        %v1173 = vld [vmem:[%s324] sm:$0x1]
        %v1174 = vlaneseq
        %v1175 = vshrl.u32 %v1174, 7
        %v1176 = vlaneseq
        %v1177 = vand.u32 %v1176, 127
        %v1178 = vstv %s1091
        %v1179 = vadd.s32 %v1177, %v1178
        %vm1180 = vcmp.gt.f32.partialorder %v1173, 0.0
        %v1181 = vsel %vm1180, 1, 0
        %v1182 = vlaneseq
        %v1183 = vshrl.u32 %v1182, 7
        %v1184 = vsub.s32 0, %v1183
        %v1185 = vrot.slane %v1181, %v1184
        %vm1186 = vcmp.eq.s32.totalorder %v1185, 1
        %v1187 = vsel %vm1186, %v1168, -1.25e+11
        %vm1188 = vcmp.gt.s32.totalorder %v1175, %v1179
        %v1189 = vsel %vm1188, -1.25e+11, 0.0
        %v1190 = vadd.f32 %v1187, %v1189
        %1191 = vst [vmem:[%s300] sm:$0xff] %v1190
        %s1192 = sand.u32 %s182, 1
        %s1193 = scalar_lea.sflag [#allocation5], %s1192
        %s1194 = sand.u32 %s182, 1
        %s1195 = smul.addr %s1194, 8
        %s1196 = scalar_lea.vmem [#allocation4], %s1195
        // Predicated region
        $region45: #{tpu_custom_call.1} parent=39 // pred_check
          %p1197 = pneg %p192
        $region46: #{tpu_custom_call.1} parent=39 // pred_check_branch
          %1199 = sbr.rel (%p1197) target = $region48
        $region47: #{tpu_custom_call.1} parent=39 // pred_region
          %s1201 = ssub.s32 128, 128
          %1202 = vsyncadd %s1193, %s1201
          %s1203 = sadd.s32 %s26, %s25
          %s1204 = smul.addr %s24, 4
          %s1205 = sadd.s32 %s1203, %s1204
          %s1206 = smul.addr %s1205, 128
          %s1207 = scalar_lea.hbm %s5, %s1206
          %s1209 = sshll.u32 %s1196, 4
          %s1210 = int_to_ptr.vmem [resolvable:$true] %s1209
          %1212 = dma.vmem_to_hbm [thread:$0]  %s1210, 128, %s1207, %s1193
        $region48: #{tpu_custom_call.1} parent=39 // pred_fallthru
          _
      $region40: #{tpu_custom_call.1} parent=5 // pred_fallthru
        _
      %p1213 = scmp.le.s32.totalorder 2, %s14
      // Predicated region
      $region49: #{tpu_custom_call.1} parent=5 // pred_check
        %p1214 = pneg %p1213
      $region50: #{tpu_custom_call.1} parent=5 // pred_check_branch
        %1216 = sbr.rel (%p1214) target = $region52
      $region51: #{tpu_custom_call.1} parent=5 // pred_region
        %s1217 = ssub.s32 %s14, 2
        // Predicated region
        $region53: #{tpu_custom_call.1} parent=51 // pred_check
          %p1218 = pneg %p198
        $region54: #{tpu_custom_call.1} parent=51 // pred_check_branch
          %1220 = sbr.rel (%p1218) target = $region56
        $region55: #{tpu_custom_call.1} parent=51 // pred_region
          %s1221 = sand.u32 %s183, 1
          %s1222 = scalar_lea.sflag [#allocation5], %s1221
          %s1223 = sand.u32 %s183, 1
          %s1224 = smul.addr %s1223, 8
          %s1225 = scalar_lea.vmem [#allocation4], %s1224
          %1226 = dma.done %s1222, 128
        $region56: #{tpu_custom_call.1} parent=51 // pred_fallthru
          _
      $region52: #{tpu_custom_call.1} parent=5 // pred_fallthru
        _
    $region6: #{tpu_custom_call.1} parent=1 // loop_footer
      %s18 = sadd.s32 1, %s14
    $region7: #{tpu_custom_call.1} parent=1 // loop_footer_branch
      %13 = sbr.rel target = $region3
    $region8: #{tpu_custom_call.1} parent=1 // loop_exit
      _
    %1227 = vsyncpa [#allocation5], 1
    %s1228 = scalar_lea.sflag [#allocation5], 1
    %1229 = vsyncpa %s1228, 1

</llo_original>
